<compile_context>
chip_gen: v7x
topology: tpu7x:2x2x1
jax: 0.10.0
libtpu: 0.0.40
codegen_flags: <defaults>
</compile_context>

<pallas_src>
import jax
import jax.numpy as jnp
import numpy as np
from jax import lax
from jax.experimental import pallas as pl
from jax.experimental.pallas import tpu as pltpu


def actor_net_forward(x, params):
    """x: (S, B, D_in) float32. params: dict of pre-transposed weights + biases."""
    S, B, D_in = x.shape
    H = params["w_ih_t"].shape[1]
    O = params["w2_t"].shape[1]

    # Pad batch to a multiple of 8 sublanes; padded rows are independent in the
    # recurrence and are sliced away at the end.
    Bp = max(8, ((B + 7) // 8) * 8)
    if Bp != B:
        x = jnp.pad(x, ((0, 0), (0, Bp - B), (0, 0)))
    x2 = x.reshape(S * Bp, D_in)                       # flat (time*batch, feature) slab

    wih = params["w_ih_t"]                             # (D_in, H)
    whh = params["w_hh_t"]                             # (H, H)
    b_r = (params["b_ih"] + params["b_hh"]).reshape(1, H)   # pre-added RNN bias
    w1 = params["w1_t"]                                # (H, H)
    b1 = params["b1"].reshape(1, H)
    w2 = params["w2_t"]                                # (H, O)
    b2 = params["b2"].reshape(1, O)

    def kernel(x_ref, wih_ref, whh_ref, br_ref, w1_ref, b1_ref, w2_ref, b2_ref,
               out_ref, hs_ref):
        # 1) Input projection for ALL timesteps at once (off the serial path).
        x_proj = (jnp.dot(x_ref[...], wih_ref[...],
                          preferred_element_type=jnp.float32) + br_ref[...])  # (S*Bp, H)

        # 2) Serial tanh recurrence. S is small and static, so the loop is
        #    fully unrolled in-kernel; only h @ W_hh + tanh stays on the
        #    critical path. Slices start at multiples of Bp (>= 8) -> aligned.
        whh = whh_ref[...]
        h = jnp.zeros((Bp, H), jnp.float32)
        for t in range(S):
            h = jnp.tanh(x_proj[t * Bp:(t + 1) * Bp, :]
                         + jnp.dot(h, whh, preferred_element_type=jnp.float32))
            hs_ref[t * Bp:(t + 1) * Bp, :] = h

        # 3) fc1/fc2 hoisted out of the recurrence: one batched matmul pair
        #    over all S*Bp rows, single writeback at the end.
        hs = hs_ref[...]
        f1 = jnp.dot(hs, w1_ref[...], preferred_element_type=jnp.float32) + b1_ref[...]
        f2 = jnp.dot(f1, w2_ref[...], preferred_element_type=jnp.float32) + b2_ref[...]
        out_ref[...] = f2.astype(out_ref.dtype)

    def full_spec(a):
        nd = a.ndim
        return pl.BlockSpec(a.shape, lambda i, _nd=nd: (0,) * _nd)

    out2 = pl.pallas_call(
        kernel,
        out_shape=jax.ShapeDtypeStruct((S * Bp, O), jnp.float32),
        grid_spec=pltpu.PrefetchScalarGridSpec(
            num_scalar_prefetch=0,
            grid=(1,),
            in_specs=[full_spec(a) for a in (x2, wih, whh, b_r, w1, b1, w2, b2)],
            out_specs=pl.BlockSpec((S * Bp, O), lambda i: (0, 0)),
            scratch_shapes=[pltpu.VMEM((S * Bp, H), jnp.float32)],
        ),
        compiler_params=pltpu.CompilerParams(
            dimension_semantics=("arbitrary",)),
    )(x2, wih, whh, b_r, w1, b1, w2, b2)

    return out2.reshape(S, Bp, O)[:, :B, :]


def actor_net_reference(x, params):
    """Pure-JAX reference matching PyTorch nn.RNN(tanh) + fc1 + fc2."""
    S, B, D_in = x.shape
    H = params["w_ih_t"].shape[1]

    def step(h, x_t):
        h_new = jnp.tanh(x_t @ params["w_ih_t"] + params["b_ih"]
                         + h @ params["w_hh_t"] + params["b_hh"])
        return h_new, h_new

    h0 = jnp.zeros((B, H), jnp.float32)
    _, hs = lax.scan(step, h0, x)                       # (S, B, H)
    f1 = hs @ params["w1_t"] + params["b1"]
    f2 = f1 @ params["w2_t"] + params["b2"]
    return f2


def init_params(key, input_dim, hidden_dim, output_dim):
    # Deterministic synthetic init (uniform, roughly PyTorch-style scale).
    ks = jax.random.split(key, 8)

    def u(k, shape, fan_in):
        bound = 1.0 / np.sqrt(fan_in)
        return jax.random.uniform(k, shape, jnp.float32, -bound, bound)

    # Stored pre-transposed so the kernel does x @ W (no in-kernel transpose).
    return {
        "w_ih_t": u(ks[0], (input_dim, hidden_dim), hidden_dim),
        "w_hh_t": u(ks[1], (hidden_dim, hidden_dim), hidden_dim),
        "b_ih":   u(ks[2], (hidden_dim,), hidden_dim),
        "b_hh":   u(ks[3], (hidden_dim,), hidden_dim),
        "w1_t":   u(ks[4], (hidden_dim, hidden_dim), hidden_dim),
        "b1":     u(ks[5], (hidden_dim,), hidden_dim),
        "w2_t":   u(ks[6], (hidden_dim, output_dim), hidden_dim),
        "b2":     u(ks[7], (output_dim,), hidden_dim),
    }


if __name__ == "__main__":
    seq_len, batch, input_dim, hidden_dim, output_dim = 8, 2, 16, 32, 8

    key = jax.random.PRNGKey(0)
    k_x, k_p = jax.random.split(key)
    x = jax.random.normal(k_x, (seq_len, batch, input_dim), jnp.float32)
    params = init_params(k_p, input_dim, hidden_dim, output_dim)

    out = actor_net_forward(x, params)
    out = jax.block_until_ready(out)

    ref = actor_net_reference(x, params)
    np.testing.assert_allclose(np.asarray(out), np.asarray(ref), rtol=1e-5, atol=1e-5)

    print("KERNEL_OK")
</pallas_src>

<mosaic_0001>
module attributes {stable_mosaic.version = 11 : i64} {
  func.func @kernel(%arg0: i32, %arg1: memref<64x16xf32, #tpu.memory_space<vmem>>, %arg2: memref<16x32xf32, #tpu.memory_space<vmem>>, %arg3: memref<32x32xf32, #tpu.memory_space<vmem>>, %arg4: memref<1x32xf32, #tpu.memory_space<vmem>>, %arg5: memref<32x32xf32, #tpu.memory_space<vmem>>, %arg6: memref<1x32xf32, #tpu.memory_space<vmem>>, %arg7: memref<32x8xf32, #tpu.memory_space<vmem>>, %arg8: memref<1x8xf32, #tpu.memory_space<vmem>>, %arg9: memref<64x8xf32, #tpu.memory_space<vmem>>, %arg10: memref<64x32xf32, #tpu.memory_space<vmem>>) attributes {dimension_semantics = [#tpu.dimension_semantics<arbitrary>], iteration_bounds = array<i64: 1>, scalar_prefetch = 0 : i64, scratch_operands = 1 : i64, tpu.core_type = #tpu.core_type<tc>, window_params = [{pipeline_mode = #tpu.pipeline_mode<synchronous>, transform_indices = @transform_0, window_bounds = array<i64: 64, 16>}, {pipeline_mode = #tpu.pipeline_mode<synchronous>, transform_indices = @transform_1, window_bounds = array<i64: 16, 32>}, {pipeline_mode = #tpu.pipeline_mode<synchronous>, transform_indices = @transform_2, window_bounds = array<i64: 32, 32>}, {pipeline_mode = #tpu.pipeline_mode<synchronous>, transform_indices = @transform_3, window_bounds = array<i64: 1, 32>}, {pipeline_mode = #tpu.pipeline_mode<synchronous>, transform_indices = @transform_4, window_bounds = array<i64: 32, 32>}, {pipeline_mode = #tpu.pipeline_mode<synchronous>, transform_indices = @transform_5, window_bounds = array<i64: 1, 32>}, {pipeline_mode = #tpu.pipeline_mode<synchronous>, transform_indices = @transform_6, window_bounds = array<i64: 32, 8>}, {pipeline_mode = #tpu.pipeline_mode<synchronous>, transform_indices = @transform_7, window_bounds = array<i64: 1, 8>}, {pipeline_mode = #tpu.pipeline_mode<synchronous>, transform_indices = @transform_8, window_bounds = array<i64: 64, 8>}]} {
    %c0 = arith.constant 0 : index
    %c0_0 = arith.constant 0 : index
    %0 = vector.load %arg1[%c0, %c0_0] : memref<64x16xf32, #tpu.memory_space<vmem>>, vector<64x16xf32>
    %c0_1 = arith.constant 0 : index
    %c0_2 = arith.constant 0 : index
    %1 = vector.load %arg2[%c0_1, %c0_2] : memref<16x32xf32, #tpu.memory_space<vmem>>, vector<16x32xf32>
    %cst = arith.constant dense<0.000000e+00> : vector<64x32xf32>
    %2 = tpu.matmul %0, %1, %cst {dimension_numbers = #tpu.dot_dimension_numbers<[1], [0], [0], [1], [0, 0, 1, 1], [], []>} : vector<64x16xf32>, vector<16x32xf32>, vector<64x32xf32> -> vector<64x32xf32>
    %c0_3 = arith.constant 0 : index
    %c0_4 = arith.constant 0 : index
    %3 = vector.load %arg4[%c0_3, %c0_4] : memref<1x32xf32, #tpu.memory_space<vmem>>, vector<1x32xf32>
    %4 = vector.broadcast %3 : vector<1x32xf32> to vector<64x32xf32>
    %5 = arith.addf %2, %4 : vector<64x32xf32>
    %c0_5 = arith.constant 0 : index
    %c0_6 = arith.constant 0 : index
    %6 = vector.load %arg3[%c0_5, %c0_6] : memref<32x32xf32, #tpu.memory_space<vmem>>, vector<32x32xf32>
    %cst_7 = arith.constant 0.000000e+00 : f32
    %7 = vector.broadcast %cst_7 : f32 to vector<8x32xf32>
    %8 = vector.extract_strided_slice %5 {offsets = [0, 0], sizes = [8, 32], strides = [1, 1]} : vector<64x32xf32> to vector<8x32xf32>
    %cst_8 = arith.constant dense<0.000000e+00> : vector<8x32xf32>
    %9 = tpu.matmul %7, %6, %cst_8 {dimension_numbers = #tpu.dot_dimension_numbers<[1], [0], [0], [1], [0, 0, 1, 1], [], []>} : vector<8x32xf32>, vector<32x32xf32>, vector<8x32xf32> -> vector<8x32xf32>
    %10 = arith.addf %8, %9 : vector<8x32xf32>
    %11 = math.tanh %10 : vector<8x32xf32>
    %c0_9 = arith.constant 0 : index
    %c0_10 = arith.constant 0 : index
    %12 = vector.load %arg10[%c0_9, %c0_10] : memref<64x32xf32, #tpu.memory_space<vmem>>, vector<8x32xf32>
    tpu.vector_store %arg10[%c0_9, %c0_10], %11 {strides = array<i32>} : memref<64x32xf32, #tpu.memory_space<vmem>>, vector<8x32xf32>,
    %13 = vector.extract_strided_slice %5 {offsets = [8, 0], sizes = [8, 32], strides = [1, 1]} : vector<64x32xf32> to vector<8x32xf32>
    %cst_11 = arith.constant dense<0.000000e+00> : vector<8x32xf32>
    %14 = tpu.matmul %11, %6, %cst_11 {dimension_numbers = #tpu.dot_dimension_numbers<[1], [0], [0], [1], [0, 0, 1, 1], [], []>} : vector<8x32xf32>, vector<32x32xf32>, vector<8x32xf32> -> vector<8x32xf32>
    %15 = arith.addf %13, %14 : vector<8x32xf32>
    %16 = math.tanh %15 : vector<8x32xf32>
    %c8 = arith.constant 8 : index
    %c0_12 = arith.constant 0 : index
    %17 = vector.load %arg10[%c8, %c0_12] : memref<64x32xf32, #tpu.memory_space<vmem>>, vector<8x32xf32>
    tpu.vector_store %arg10[%c8, %c0_12], %16 {strides = array<i32>} : memref<64x32xf32, #tpu.memory_space<vmem>>, vector<8x32xf32>,
    %18 = vector.extract_strided_slice %5 {offsets = [16, 0], sizes = [8, 32], strides = [1, 1]} : vector<64x32xf32> to vector<8x32xf32>
    %cst_13 = arith.constant dense<0.000000e+00> : vector<8x32xf32>
    %19 = tpu.matmul %16, %6, %cst_13 {dimension_numbers = #tpu.dot_dimension_numbers<[1], [0], [0], [1], [0, 0, 1, 1], [], []>} : vector<8x32xf32>, vector<32x32xf32>, vector<8x32xf32> -> vector<8x32xf32>
    %20 = arith.addf %18, %19 : vector<8x32xf32>
    %21 = math.tanh %20 : vector<8x32xf32>
    %c16 = arith.constant 16 : index
    %c0_14 = arith.constant 0 : index
    %22 = vector.load %arg10[%c16, %c0_14] : memref<64x32xf32, #tpu.memory_space<vmem>>, vector<8x32xf32>
    tpu.vector_store %arg10[%c16, %c0_14], %21 {strides = array<i32>} : memref<64x32xf32, #tpu.memory_space<vmem>>, vector<8x32xf32>,
    %23 = vector.extract_strided_slice %5 {offsets = [24, 0], sizes = [8, 32], strides = [1, 1]} : vector<64x32xf32> to vector<8x32xf32>
    %cst_15 = arith.constant dense<0.000000e+00> : vector<8x32xf32>
    %24 = tpu.matmul %21, %6, %cst_15 {dimension_numbers = #tpu.dot_dimension_numbers<[1], [0], [0], [1], [0, 0, 1, 1], [], []>} : vector<8x32xf32>, vector<32x32xf32>, vector<8x32xf32> -> vector<8x32xf32>
    %25 = arith.addf %23, %24 : vector<8x32xf32>
    %26 = math.tanh %25 : vector<8x32xf32>
    %c24 = arith.constant 24 : index
    %c0_16 = arith.constant 0 : index
    %27 = vector.load %arg10[%c24, %c0_16] : memref<64x32xf32, #tpu.memory_space<vmem>>, vector<8x32xf32>
    tpu.vector_store %arg10[%c24, %c0_16], %26 {strides = array<i32>} : memref<64x32xf32, #tpu.memory_space<vmem>>, vector<8x32xf32>,
    %28 = vector.extract_strided_slice %5 {offsets = [32, 0], sizes = [8, 32], strides = [1, 1]} : vector<64x32xf32> to vector<8x32xf32>
    %cst_17 = arith.constant dense<0.000000e+00> : vector<8x32xf32>
    %29 = tpu.matmul %26, %6, %cst_17 {dimension_numbers = #tpu.dot_dimension_numbers<[1], [0], [0], [1], [0, 0, 1, 1], [], []>} : vector<8x32xf32>, vector<32x32xf32>, vector<8x32xf32> -> vector<8x32xf32>
    %30 = arith.addf %28, %29 : vector<8x32xf32>
    %31 = math.tanh %30 : vector<8x32xf32>
    %c32 = arith.constant 32 : index
    %c0_18 = arith.constant 0 : index
    %32 = vector.load %arg10[%c32, %c0_18] : memref<64x32xf32, #tpu.memory_space<vmem>>, vector<8x32xf32>
    tpu.vector_store %arg10[%c32, %c0_18], %31 {strides = array<i32>} : memref<64x32xf32, #tpu.memory_space<vmem>>, vector<8x32xf32>,
    %33 = vector.extract_strided_slice %5 {offsets = [40, 0], sizes = [8, 32], strides = [1, 1]} : vector<64x32xf32> to vector<8x32xf32>
    %cst_19 = arith.constant dense<0.000000e+00> : vector<8x32xf32>
    %34 = tpu.matmul %31, %6, %cst_19 {dimension_numbers = #tpu.dot_dimension_numbers<[1], [0], [0], [1], [0, 0, 1, 1], [], []>} : vector<8x32xf32>, vector<32x32xf32>, vector<8x32xf32> -> vector<8x32xf32>
    %35 = arith.addf %33, %34 : vector<8x32xf32>
    %36 = math.tanh %35 : vector<8x32xf32>
    %c40 = arith.constant 40 : index
    %c0_20 = arith.constant 0 : index
    %37 = vector.load %arg10[%c40, %c0_20] : memref<64x32xf32, #tpu.memory_space<vmem>>, vector<8x32xf32>
    tpu.vector_store %arg10[%c40, %c0_20], %36 {strides = array<i32>} : memref<64x32xf32, #tpu.memory_space<vmem>>, vector<8x32xf32>,
    %38 = vector.extract_strided_slice %5 {offsets = [48, 0], sizes = [8, 32], strides = [1, 1]} : vector<64x32xf32> to vector<8x32xf32>
    %cst_21 = arith.constant dense<0.000000e+00> : vector<8x32xf32>
    %39 = tpu.matmul %36, %6, %cst_21 {dimension_numbers = #tpu.dot_dimension_numbers<[1], [0], [0], [1], [0, 0, 1, 1], [], []>} : vector<8x32xf32>, vector<32x32xf32>, vector<8x32xf32> -> vector<8x32xf32>
    %40 = arith.addf %38, %39 : vector<8x32xf32>
    %41 = math.tanh %40 : vector<8x32xf32>
    %c48 = arith.constant 48 : index
    %c0_22 = arith.constant 0 : index
    %42 = vector.load %arg10[%c48, %c0_22] : memref<64x32xf32, #tpu.memory_space<vmem>>, vector<8x32xf32>
    tpu.vector_store %arg10[%c48, %c0_22], %41 {strides = array<i32>} : memref<64x32xf32, #tpu.memory_space<vmem>>, vector<8x32xf32>,
    %43 = vector.extract_strided_slice %5 {offsets = [56, 0], sizes = [8, 32], strides = [1, 1]} : vector<64x32xf32> to vector<8x32xf32>
    %cst_23 = arith.constant dense<0.000000e+00> : vector<8x32xf32>
    %44 = tpu.matmul %41, %6, %cst_23 {dimension_numbers = #tpu.dot_dimension_numbers<[1], [0], [0], [1], [0, 0, 1, 1], [], []>} : vector<8x32xf32>, vector<32x32xf32>, vector<8x32xf32> -> vector<8x32xf32>
    %45 = arith.addf %43, %44 : vector<8x32xf32>
    %46 = math.tanh %45 : vector<8x32xf32>
    %c56 = arith.constant 56 : index
    %c0_24 = arith.constant 0 : index
    %47 = vector.load %arg10[%c56, %c0_24] : memref<64x32xf32, #tpu.memory_space<vmem>>, vector<8x32xf32>
    tpu.vector_store %arg10[%c56, %c0_24], %46 {strides = array<i32>} : memref<64x32xf32, #tpu.memory_space<vmem>>, vector<8x32xf32>,
    %c0_25 = arith.constant 0 : index
    %c0_26 = arith.constant 0 : index
    %48 = vector.load %arg10[%c0_25, %c0_26] : memref<64x32xf32, #tpu.memory_space<vmem>>, vector<64x32xf32>
    %c0_27 = arith.constant 0 : index
    %c0_28 = arith.constant 0 : index
    %49 = vector.load %arg5[%c0_27, %c0_28] : memref<32x32xf32, #tpu.memory_space<vmem>>, vector<32x32xf32>
    %cst_29 = arith.constant dense<0.000000e+00> : vector<64x32xf32>
    %50 = tpu.matmul %48, %49, %cst_29 {dimension_numbers = #tpu.dot_dimension_numbers<[1], [0], [0], [1], [0, 0, 1, 1], [], []>} : vector<64x32xf32>, vector<32x32xf32>, vector<64x32xf32> -> vector<64x32xf32>
    %c0_30 = arith.constant 0 : index
    %c0_31 = arith.constant 0 : index
    %51 = vector.load %arg6[%c0_30, %c0_31] : memref<1x32xf32, #tpu.memory_space<vmem>>, vector<1x32xf32>
    %52 = vector.broadcast %51 : vector<1x32xf32> to vector<64x32xf32>
    %53 = arith.addf %50, %52 : vector<64x32xf32>
    %c0_32 = arith.constant 0 : index
    %c0_33 = arith.constant 0 : index
    %54 = vector.load %arg7[%c0_32, %c0_33] : memref<32x8xf32, #tpu.memory_space<vmem>>, vector<32x8xf32>
    %cst_34 = arith.constant dense<0.000000e+00> : vector<64x8xf32>
    %55 = tpu.matmul %53, %54, %cst_34 {dimension_numbers = #tpu.dot_dimension_numbers<[1], [0], [0], [1], [0, 0, 1, 1], [], []>} : vector<64x32xf32>, vector<32x8xf32>, vector<64x8xf32> -> vector<64x8xf32>
    %c0_35 = arith.constant 0 : index
    %c0_36 = arith.constant 0 : index
    %56 = vector.load %arg8[%c0_35, %c0_36] : memref<1x8xf32, #tpu.memory_space<vmem>>, vector<1x8xf32>
    %57 = vector.broadcast %56 : vector<1x8xf32> to vector<64x8xf32>
    %58 = arith.addf %55, %57 : vector<64x8xf32>
    %c0_37 = arith.constant 0 : index
    %c0_38 = arith.constant 0 : index
    %59 = vector.load %arg9[%c0_37, %c0_38] : memref<64x8xf32, #tpu.memory_space<vmem>>, vector<64x8xf32>
    tpu.vector_store %arg9[%c0_37, %c0_38], %58 {strides = array<i32>} : memref<64x8xf32, #tpu.memory_space<vmem>>, vector<64x8xf32>,
    return
  }
  func.func @transform_0(%arg0: i32) -> (i32, i32) {
    %c0_i32 = arith.constant 0 : i32
    %c0_i32_0 = arith.constant 0 : i32
    %c0_i32_1 = arith.constant 0 : i32
    return %c0_i32, %c0_i32_0 : i32, i32
  }
  func.func @transform_1(%arg0: i32) -> (i32, i32) {
    %c0_i32 = arith.constant 0 : i32
    %c0_i32_0 = arith.constant 0 : i32
    %c0_i32_1 = arith.constant 0 : i32
    return %c0_i32, %c0_i32_0 : i32, i32
  }
  func.func @transform_2(%arg0: i32) -> (i32, i32) {
    %c0_i32 = arith.constant 0 : i32
    %c0_i32_0 = arith.constant 0 : i32
    %c0_i32_1 = arith.constant 0 : i32
    return %c0_i32, %c0_i32_0 : i32, i32
  }
  func.func @transform_3(%arg0: i32) -> (i32, i32) {
    %c0_i32 = arith.constant 0 : i32
    %c0_i32_0 = arith.constant 0 : i32
    %c0_i32_1 = arith.constant 0 : i32
    return %c0_i32, %c0_i32_0 : i32, i32
  }
  func.func @transform_4(%arg0: i32) -> (i32, i32) {
    %c0_i32 = arith.constant 0 : i32
    %c0_i32_0 = arith.constant 0 : i32
    %c0_i32_1 = arith.constant 0 : i32
    return %c0_i32, %c0_i32_0 : i32, i32
  }
  func.func @transform_5(%arg0: i32) -> (i32, i32) {
    %c0_i32 = arith.constant 0 : i32
    %c0_i32_0 = arith.constant 0 : i32
    %c0_i32_1 = arith.constant 0 : i32
    return %c0_i32, %c0_i32_0 : i32, i32
  }
  func.func @transform_6(%arg0: i32) -> (i32, i32) {
    %c0_i32 = arith.constant 0 : i32
    %c0_i32_0 = arith.constant 0 : i32
    %c0_i32_1 = arith.constant 0 : i32
    return %c0_i32, %c0_i32_0 : i32, i32
  }
  func.func @transform_7(%arg0: i32) -> (i32, i32) {
    %c0_i32 = arith.constant 0 : i32
    %c0_i32_0 = arith.constant 0 : i32
    %c0_i32_1 = arith.constant 0 : i32
    return %c0_i32, %c0_i32_0 : i32, i32
  }
  func.func @transform_8(%arg0: i32) -> (i32, i32) {
    %c0_i32 = arith.constant 0 : i32
    %c0_i32_0 = arith.constant 0 : i32
    %c0_i32_1 = arith.constant 0 : i32
    return %c0_i32, %c0_i32_0 : i32, i32
  }
}

</mosaic_0001>

<llo_original>
// kernel: tpu_custom_call.1
$region0: #{tpu_custom_call.1}
  #allocation0 [shape = 'u32[]', space=smem, size = 0x4, offset = 0x4, fixed_abs, tag = 'smem constant byte address 0x4 - core index']
  #allocation1 [shape = 'u32[144,128]{1,0:T(1,128)}', space=vmem, size = 0x12000, scoped, tag = 'internal scratch']
  #allocation2 [shape = 'f32[64,32]{1,0:T(8,128)}', space=vmem, size = 0x8000, scoped, tag = 'scratch operand']
  %s0 = inlined_call_operand.vmem [shape: f32[64,16], index: 0, kind: input, shape index: {}]
  %s1 = inlined_call_operand.vmem [shape: f32[16,32], index: 1, kind: input, shape index: {}]
  %s2 = inlined_call_operand.vmem [shape: f32[32,32], index: 2, kind: input, shape index: {}]
  %s3 = inlined_call_operand.vmem [shape: f32[1,32], index: 3, kind: input, shape index: {}]
  %s4 = inlined_call_operand.vmem [shape: f32[32,32], index: 4, kind: input, shape index: {}]
  %s5 = inlined_call_operand.vmem [shape: f32[1,32], index: 5, kind: input, shape index: {}]
  %s6 = inlined_call_operand.vmem [shape: f32[32,8], index: 6, kind: input, shape index: {}]
  %s7 = inlined_call_operand.vmem [shape: f32[1,8], index: 7, kind: input, shape index: {}]
  %s8 = inlined_call_operand.vmem [shape: f32[64,8], index: 8, kind: output, shape index: {}]
  %s9 = sld [smem:[#allocation0]]
  $region42: #{tpu_custom_call.1} parent=0
    _
  %s11 = ssub.s32 1, %s9
  %s12 = scalar_select 0, %s11, %s9
  // Predicated region
  $region2: #{tpu_custom_call.1} parent=0 // pred_check
    _
  $region3: #{tpu_custom_call.1} parent=0 // pred_check_branch
    %14 = sbr.rel (0) target = $region5
  $region4: #{tpu_custom_call.1} parent=0 // pred_region
    _
  $region5: #{tpu_custom_call.1} parent=0 // pred_fallthru
    _
  // Predicated region
  $region6: #{tpu_custom_call.1} parent=0 // pred_check
    _
  $region7: #{tpu_custom_call.1} parent=0 // pred_check_branch
    %16 = sbr.rel (0) target = $region9
  $region8: #{tpu_custom_call.1} parent=0 // pred_region
    _
  $region9: #{tpu_custom_call.1} parent=0 // pred_fallthru
    _
  // Predicated region
  $region10: #{tpu_custom_call.1} parent=0 // pred_check
    _
  $region11: #{tpu_custom_call.1} parent=0 // pred_check_branch
    %18 = sbr.rel (0) target = $region13
  $region12: #{tpu_custom_call.1} parent=0 // pred_region
    _
  $region13: #{tpu_custom_call.1} parent=0 // pred_fallthru
    _
  // Predicated region
  $region14: #{tpu_custom_call.1} parent=0 // pred_check
    _
  $region15: #{tpu_custom_call.1} parent=0 // pred_check_branch
    %20 = sbr.rel (0) target = $region17
  $region16: #{tpu_custom_call.1} parent=0 // pred_region
    _
  $region17: #{tpu_custom_call.1} parent=0 // pred_fallthru
    _
  // Predicated region
  $region18: #{tpu_custom_call.1} parent=0 // pred_check
    _
  $region19: #{tpu_custom_call.1} parent=0 // pred_check_branch
    %22 = sbr.rel (0) target = $region21
  $region20: #{tpu_custom_call.1} parent=0 // pred_region
    _
  $region21: #{tpu_custom_call.1} parent=0 // pred_fallthru
    _
  // Predicated region
  $region22: #{tpu_custom_call.1} parent=0 // pred_check
    _
  $region23: #{tpu_custom_call.1} parent=0 // pred_check_branch
    %24 = sbr.rel (0) target = $region25
  $region24: #{tpu_custom_call.1} parent=0 // pred_region
    _
  $region25: #{tpu_custom_call.1} parent=0 // pred_fallthru
    _
  // Predicated region
  $region26: #{tpu_custom_call.1} parent=0 // pred_check
    _
  $region27: #{tpu_custom_call.1} parent=0 // pred_check_branch
    %26 = sbr.rel (0) target = $region29
  $region28: #{tpu_custom_call.1} parent=0 // pred_region
    _
  $region29: #{tpu_custom_call.1} parent=0 // pred_fallthru
    _
  // Predicated region
  $region30: #{tpu_custom_call.1} parent=0 // pred_check
    _
  $region31: #{tpu_custom_call.1} parent=0 // pred_check_branch
    %28 = sbr.rel (0) target = $region33
  $region32: #{tpu_custom_call.1} parent=0 // pred_region
    _
  $region33: #{tpu_custom_call.1} parent=0 // pred_fallthru
    _
  %v29 = vld [vmem:[%s0] sm:$0xff]
  %v30 = vld [vmem:[%s0 + $0x8] sm:$0xff]
  %v31 = vld [vmem:[%s0 + $0x10] sm:$0xff]
  %v32 = vld [vmem:[%s0 + $0x18] sm:$0xff]
  %v33 = vld [vmem:[%s0 + $0x20] sm:$0xff]
  %v34 = vld [vmem:[%s0 + $0x28] sm:$0xff]
  %v35 = vld [vmem:[%s0 + $0x30] sm:$0xff]
  %v36 = vld [vmem:[%s0 + $0x38] sm:$0xff]
  %v37 = vld [vmem:[%s1] sm:$0xff]
  %v38 = vld [vmem:[%s1 + $0x8] sm:$0xff]
  %v39 = vld [vmem:[%s3] sm:$0x1]
  %v41 = vlaneseq
  %v42 = vshrl.u32 %v41, 7
  %v43 = vsub.s32 0, %v42
  %v44 = vrot.slane %v39, %v43
  %vm46 = vcmask 130048
  %v48 = vsel %vm46, %v29, 0
  %v51 = vsel %vm46, %v30, 0
  %v54 = vsel %vm46, %v31, 0
  %v57 = vsel %vm46, %v32, 0
  %v60 = vsel %vm46, %v33, 0
  %v63 = vsel %vm46, %v34, 0
  %v66 = vsel %vm46, %v35, 0
  %v69 = vsel %vm46, %v36, 0
  %71 = vmatprep.subr.mxu0 0.0
  %72 = vmatpush1.msra.mxu0 %v37
  %73 = vmatprep.subr.mxu0 0.0
  %74 = vmatpush1.msra.mxu0 %v38
  %75 = vmatprep.subr.mxu0 0.0
  %76 = vmatpush1.msra.mxu0 0.0
  %77 = vmatprep.subr.mxu0 0.0
  %78 = vmatpush1.msra.mxu0 0.0
  %79 = vmatprep.subr.mxu0 0.0
  %80 = vmatpush1.msra.mxu0 0.0
  %81 = vmatprep.subr.mxu0 0.0
  %82 = vmatpush1.msra.mxu0 0.0
  %83 = vmatprep.subr.mxu0 0.0
  %84 = vmatpush1.msra.mxu0 0.0
  %85 = vmatprep.subr.mxu0 0.0
  %86 = vmatpush1.msra.mxu0 0.0
  %87 = vmatprep.subr.mxu0 0.0
  %88 = vmatpush1.msra.mxu0 0.0
  %89 = vmatprep.subr.mxu0 0.0
  %90 = vmatpush1.msra.mxu0 0.0
  %91 = vmatprep.subr.mxu0 0.0
  %92 = vmatpush1.msra.mxu0 0.0
  %93 = vmatprep.subr.mxu0 0.0
  %94 = vmatpush1.msra.mxu0 0.0
  %95 = vmatprep.subr.mxu0 0.0
  %96 = vmatpush1.msra.mxu0 0.0
  %97 = vmatprep.subr.mxu0 0.0
  %98 = vmatpush1.msra.mxu0 0.0
  %99 = vmatprep.subr.mxu0 0.0
  %100 = vmatpush1.msra.mxu0 0.0
  %101 = vmatprep.subr.mxu0 0.0
  %102 = vmatpush1.msra.mxu0 0.0
  %103 = vmatprep.subr.mxu0 0.0
  %104 = vmatpush1.msra.mxu0 0.0
  %105 = vmatprep.subr.mxu0 0.0
  %106 = vmatpush1.msra.mxu0 0.0
  %107 = vmatprep.subr.mxu0 0.0
  %108 = vmatpush1.msra.mxu0 0.0
  %109 = vmatprep.subr.mxu0 0.0
  %110 = vmatpush1.msra.mxu0 0.0
  %111 = vmatprep.subr.mxu0 0.0
  %112 = vmatpush1.msra.mxu0 0.0
  %113 = vmatprep.subr.mxu0 0.0
  %114 = vmatpush1.msra.mxu0 0.0
  %115 = vmatprep.subr.mxu0 0.0
  %116 = vmatpush1.msra.mxu0 0.0
  %117 = vmatprep.subr.mxu0 0.0
  %118 = vmatpush1.msra.mxu0 0.0
  %119 = vmatprep.subr.mxu0 0.0
  %120 = vmatpush1.msra.mxu0 0.0
  %121 = vmatprep.subr.mxu0 0.0
  %122 = vmatpush1.msra.mxu0 0.0
  %123 = vmatprep.subr.mxu0 0.0
  %124 = vmatpush1.msra.mxu0 0.0
  %125 = vmatprep.subr.mxu0 0.0
  %126 = vmatpush1.msra.mxu0 0.0
  %127 = vmatprep.subr.mxu0 0.0
  %128 = vmatpush1.msra.mxu0 0.0
  %129 = vmatprep.subr.mxu0 0.0
  %130 = vmatpush1.msra.mxu0 0.0
  %131 = vmatprep.subr.mxu0 0.0
  %132 = vmatpush1.msra.mxu0 0.0
  %133 = vmatprep.subr.mxu0 0.0
  %134 = vmatpush1.msra.mxu0 0.0
  %135 = vmatprep.mubr.f32.mxu0 0.0
  %136 = vmatmul.mubr.f32.gmra.mrb[0].mxu0 %v48
  %v137 = vpop.f32.mrb[0].mxu0
  %v138 = vadd.f32 %v44, %v137
  %v139 = vpop.f32.mrb[0].mxu0
  %140 = vmatprep.mubr.f32.mxu0 0.0
  %141 = vmatmul.mubr.f32.gmra.mrb[0].mxu0 %v51
  %v142 = vpop.f32.mrb[0].mxu0
  %v143 = vadd.f32 %v44, %v142
  %v144 = vpop.f32.mrb[0].mxu0
  %145 = vmatprep.mubr.f32.mxu0 0.0
  %146 = vmatmul.mubr.f32.gmra.mrb[0].mxu0 %v54
  %v147 = vpop.f32.mrb[0].mxu0
  %v148 = vadd.f32 %v44, %v147
  %v149 = vpop.f32.mrb[0].mxu0
  %150 = vmatprep.mubr.f32.mxu0 0.0
  %151 = vmatmul.mubr.f32.gmra.mrb[0].mxu0 %v57
  %v152 = vpop.f32.mrb[0].mxu0
  %v153 = vadd.f32 %v44, %v152
  %v154 = vpop.f32.mrb[0].mxu0
  %155 = vmatprep.mubr.f32.mxu0 0.0
  %156 = vmatmul.mubr.f32.gmra.mrb[0].mxu0 %v60
  %v157 = vpop.f32.mrb[0].mxu0
  %v158 = vadd.f32 %v44, %v157
  %v159 = vpop.f32.mrb[0].mxu0
  %160 = vmatprep.mubr.f32.mxu0 0.0
  %161 = vmatmul.mubr.f32.gmra.mrb[0].mxu0 %v63
  %v162 = vpop.f32.mrb[0].mxu0
  %v163 = vadd.f32 %v44, %v162
  %v164 = vpop.f32.mrb[0].mxu0
  %165 = vmatprep.mubr.f32.mxu0 0.0
  %166 = vmatmul.mubr.f32.gmra.mrb[0].mxu0 %v66
  %v167 = vpop.f32.mrb[0].mxu0
  %v168 = vadd.f32 %v44, %v167
  %v169 = vpop.f32.mrb[0].mxu0
  %170 = vmatprep.mubr.f32.mxu0 0.0
  %171 = vmatmul.mubr.f32.gmra.mrb[0].mxu0 %v69
  %v172 = vpop.f32.mrb[0].mxu0
  %v173 = vadd.f32 %v44, %v172
  %v174 = vpop.f32.mrb[0].mxu0
  %175 = vdwg.mxu0
  %v176 = vld [vmem:[%s2] sm:$0xff]
  %v177 = vld [vmem:[%s2 + $0x8] sm:$0xff]
  %v178 = vld [vmem:[%s2 + $0x10] sm:$0xff]
  %v179 = vld [vmem:[%s2 + $0x18] sm:$0xff]
  %vm180 = vcmask 261120
  %v182 = vsel %vm180, 0.0, 0
  %184 = vmatprep.subr.mxu0 0.0
  %185 = vmatpush1.msra.mxu0 %v176
  %186 = vmatprep.subr.mxu0 0.0
  %187 = vmatpush1.msra.mxu0 %v177
  %188 = vmatprep.subr.mxu0 0.0
  %189 = vmatpush1.msra.mxu0 %v178
  %190 = vmatprep.subr.mxu0 0.0
  %191 = vmatpush1.msra.mxu0 %v179
  %192 = vmatprep.subr.mxu0 0.0
  %193 = vmatpush1.msra.mxu0 0.0
  %194 = vmatprep.subr.mxu0 0.0
  %195 = vmatpush1.msra.mxu0 0.0
  %196 = vmatprep.subr.mxu0 0.0
  %197 = vmatpush1.msra.mxu0 0.0
  %198 = vmatprep.subr.mxu0 0.0
  %199 = vmatpush1.msra.mxu0 0.0
  %200 = vmatprep.subr.mxu0 0.0
  %201 = vmatpush1.msra.mxu0 0.0
  %202 = vmatprep.subr.mxu0 0.0
  %203 = vmatpush1.msra.mxu0 0.0
  %204 = vmatprep.subr.mxu0 0.0
  %205 = vmatpush1.msra.mxu0 0.0
  %206 = vmatprep.subr.mxu0 0.0
  %207 = vmatpush1.msra.mxu0 0.0
  %208 = vmatprep.subr.mxu0 0.0
  %209 = vmatpush1.msra.mxu0 0.0
  %210 = vmatprep.subr.mxu0 0.0
  %211 = vmatpush1.msra.mxu0 0.0
  %212 = vmatprep.subr.mxu0 0.0
  %213 = vmatpush1.msra.mxu0 0.0
  %214 = vmatprep.subr.mxu0 0.0
  %215 = vmatpush1.msra.mxu0 0.0
  %216 = vmatprep.subr.mxu0 0.0
  %217 = vmatpush1.msra.mxu0 0.0
  %218 = vmatprep.subr.mxu0 0.0
  %219 = vmatpush1.msra.mxu0 0.0
  %220 = vmatprep.subr.mxu0 0.0
  %221 = vmatpush1.msra.mxu0 0.0
  %222 = vmatprep.subr.mxu0 0.0
  %223 = vmatpush1.msra.mxu0 0.0
  %224 = vmatprep.subr.mxu0 0.0
  %225 = vmatpush1.msra.mxu0 0.0
  %226 = vmatprep.subr.mxu0 0.0
  %227 = vmatpush1.msra.mxu0 0.0
  %228 = vmatprep.subr.mxu0 0.0
  %229 = vmatpush1.msra.mxu0 0.0
  %230 = vmatprep.subr.mxu0 0.0
  %231 = vmatpush1.msra.mxu0 0.0
  %232 = vmatprep.subr.mxu0 0.0
  %233 = vmatpush1.msra.mxu0 0.0
  %234 = vmatprep.subr.mxu0 0.0
  %235 = vmatpush1.msra.mxu0 0.0
  %236 = vmatprep.subr.mxu0 0.0
  %237 = vmatpush1.msra.mxu0 0.0
  %238 = vmatprep.subr.mxu0 0.0
  %239 = vmatpush1.msra.mxu0 0.0
  %240 = vmatprep.subr.mxu0 0.0
  %241 = vmatpush1.msra.mxu0 0.0
  %242 = vmatprep.subr.mxu0 0.0
  %243 = vmatpush1.msra.mxu0 0.0
  %244 = vmatprep.subr.mxu0 0.0
  %245 = vmatpush1.msra.mxu0 0.0
  %246 = vmatprep.subr.mxu0 0.0
  %247 = vmatpush1.msra.mxu0 0.0
  %248 = vmatprep.mubr.f32.mxu0 0.0
  %249 = vmatmul.mubr.f32.gmra.mrb[0].mxu0 %v182
  %v250 = vpop.f32.mrb[0].mxu0
  %v251 = vadd.f32 0.0, %v250
  %v252 = vpop.f32.mrb[0].mxu0
  %253 = vdwg.mxu0
  %v254 = vadd.f32 %v138, %v251
  %v255 = vtanh.pop %v254
  %256 = vst.msk [vmem:[#allocation2] sm:$0xff] %vm180, %v255
  %v258 = vsel %vm180, %v255, 0
  %260 = vmatprep.subr.mxu0 0.0
  %261 = vmatpush1.msra.mxu0 %v176
  %262 = vmatprep.subr.mxu0 0.0
  %263 = vmatpush1.msra.mxu0 %v177
  %264 = vmatprep.subr.mxu0 0.0
  %265 = vmatpush1.msra.mxu0 %v178
  %266 = vmatprep.subr.mxu0 0.0
  %267 = vmatpush1.msra.mxu0 %v179
  %268 = vmatprep.subr.mxu0 0.0
  %269 = vmatpush1.msra.mxu0 0.0
  %270 = vmatprep.subr.mxu0 0.0
  %271 = vmatpush1.msra.mxu0 0.0
  %272 = vmatprep.subr.mxu0 0.0
  %273 = vmatpush1.msra.mxu0 0.0
  %274 = vmatprep.subr.mxu0 0.0
  %275 = vmatpush1.msra.mxu0 0.0
  %276 = vmatprep.subr.mxu0 0.0
  %277 = vmatpush1.msra.mxu0 0.0
  %278 = vmatprep.subr.mxu0 0.0
  %279 = vmatpush1.msra.mxu0 0.0
  %280 = vmatprep.subr.mxu0 0.0
  %281 = vmatpush1.msra.mxu0 0.0
  %282 = vmatprep.subr.mxu0 0.0
  %283 = vmatpush1.msra.mxu0 0.0
  %284 = vmatprep.subr.mxu0 0.0
  %285 = vmatpush1.msra.mxu0 0.0
  %286 = vmatprep.subr.mxu0 0.0
  %287 = vmatpush1.msra.mxu0 0.0
  %288 = vmatprep.subr.mxu0 0.0
  %289 = vmatpush1.msra.mxu0 0.0
  %290 = vmatprep.subr.mxu0 0.0
  %291 = vmatpush1.msra.mxu0 0.0
  %292 = vmatprep.subr.mxu0 0.0
  %293 = vmatpush1.msra.mxu0 0.0
  %294 = vmatprep.subr.mxu0 0.0
  %295 = vmatpush1.msra.mxu0 0.0
  %296 = vmatprep.subr.mxu0 0.0
  %297 = vmatpush1.msra.mxu0 0.0
  %298 = vmatprep.subr.mxu0 0.0
  %299 = vmatpush1.msra.mxu0 0.0
  %300 = vmatprep.subr.mxu0 0.0
  %301 = vmatpush1.msra.mxu0 0.0
  %302 = vmatprep.subr.mxu0 0.0
  %303 = vmatpush1.msra.mxu0 0.0
  %304 = vmatprep.subr.mxu0 0.0
  %305 = vmatpush1.msra.mxu0 0.0
  %306 = vmatprep.subr.mxu0 0.0
  %307 = vmatpush1.msra.mxu0 0.0
  %308 = vmatprep.subr.mxu0 0.0
  %309 = vmatpush1.msra.mxu0 0.0
  %310 = vmatprep.subr.mxu0 0.0
  %311 = vmatpush1.msra.mxu0 0.0
  %312 = vmatprep.subr.mxu0 0.0
  %313 = vmatpush1.msra.mxu0 0.0
  %314 = vmatprep.subr.mxu0 0.0
  %315 = vmatpush1.msra.mxu0 0.0
  %316 = vmatprep.subr.mxu0 0.0
  %317 = vmatpush1.msra.mxu0 0.0
  %318 = vmatprep.subr.mxu0 0.0
  %319 = vmatpush1.msra.mxu0 0.0
  %320 = vmatprep.subr.mxu0 0.0
  %321 = vmatpush1.msra.mxu0 0.0
  %322 = vmatprep.subr.mxu0 0.0
  %323 = vmatpush1.msra.mxu0 0.0
  %324 = vmatprep.mubr.f32.mxu0 0.0
  %325 = vmatmul.mubr.f32.gmra.mrb[0].mxu0 %v258
  %v326 = vpop.f32.mrb[0].mxu0
  %v327 = vadd.f32 0.0, %v326
  %v328 = vpop.f32.mrb[0].mxu0
  %329 = vdwg.mxu0
  %v330 = vadd.f32 %v143, %v327
  %v331 = vtanh.pop %v330
  %332 = vst.msk [vmem:[#allocation2 + $0x8] sm:$0xff] %vm180, %v331
  %v334 = vsel %vm180, %v331, 0
  %336 = vmatprep.subr.mxu0 0.0
  %337 = vmatpush1.msra.mxu0 %v176
  %338 = vmatprep.subr.mxu0 0.0
  %339 = vmatpush1.msra.mxu0 %v177
  %340 = vmatprep.subr.mxu0 0.0
  %341 = vmatpush1.msra.mxu0 %v178
  %342 = vmatprep.subr.mxu0 0.0
  %343 = vmatpush1.msra.mxu0 %v179
  %344 = vmatprep.subr.mxu0 0.0
  %345 = vmatpush1.msra.mxu0 0.0
  %346 = vmatprep.subr.mxu0 0.0
  %347 = vmatpush1.msra.mxu0 0.0
  %348 = vmatprep.subr.mxu0 0.0
  %349 = vmatpush1.msra.mxu0 0.0
  %350 = vmatprep.subr.mxu0 0.0
  %351 = vmatpush1.msra.mxu0 0.0
  %352 = vmatprep.subr.mxu0 0.0
  %353 = vmatpush1.msra.mxu0 0.0
  %354 = vmatprep.subr.mxu0 0.0
  %355 = vmatpush1.msra.mxu0 0.0
  %356 = vmatprep.subr.mxu0 0.0
  %357 = vmatpush1.msra.mxu0 0.0
  %358 = vmatprep.subr.mxu0 0.0
  %359 = vmatpush1.msra.mxu0 0.0
  %360 = vmatprep.subr.mxu0 0.0
  %361 = vmatpush1.msra.mxu0 0.0
  %362 = vmatprep.subr.mxu0 0.0
  %363 = vmatpush1.msra.mxu0 0.0
  %364 = vmatprep.subr.mxu0 0.0
  %365 = vmatpush1.msra.mxu0 0.0
  %366 = vmatprep.subr.mxu0 0.0
  %367 = vmatpush1.msra.mxu0 0.0
  %368 = vmatprep.subr.mxu0 0.0
  %369 = vmatpush1.msra.mxu0 0.0
  %370 = vmatprep.subr.mxu0 0.0
  %371 = vmatpush1.msra.mxu0 0.0
  %372 = vmatprep.subr.mxu0 0.0
  %373 = vmatpush1.msra.mxu0 0.0
  %374 = vmatprep.subr.mxu0 0.0
  %375 = vmatpush1.msra.mxu0 0.0
  %376 = vmatprep.subr.mxu0 0.0
  %377 = vmatpush1.msra.mxu0 0.0
  %378 = vmatprep.subr.mxu0 0.0
  %379 = vmatpush1.msra.mxu0 0.0
  %380 = vmatprep.subr.mxu0 0.0
  %381 = vmatpush1.msra.mxu0 0.0
  %382 = vmatprep.subr.mxu0 0.0
  %383 = vmatpush1.msra.mxu0 0.0
  %384 = vmatprep.subr.mxu0 0.0
  %385 = vmatpush1.msra.mxu0 0.0
  %386 = vmatprep.subr.mxu0 0.0
  %387 = vmatpush1.msra.mxu0 0.0
  %388 = vmatprep.subr.mxu0 0.0
  %389 = vmatpush1.msra.mxu0 0.0
  %390 = vmatprep.subr.mxu0 0.0
  %391 = vmatpush1.msra.mxu0 0.0
  %392 = vmatprep.subr.mxu0 0.0
  %393 = vmatpush1.msra.mxu0 0.0
  %394 = vmatprep.subr.mxu0 0.0
  %395 = vmatpush1.msra.mxu0 0.0
  %396 = vmatprep.subr.mxu0 0.0
  %397 = vmatpush1.msra.mxu0 0.0
  %398 = vmatprep.subr.mxu0 0.0
  %399 = vmatpush1.msra.mxu0 0.0
  %400 = vmatprep.mubr.f32.mxu0 0.0
  %401 = vmatmul.mubr.f32.gmra.mrb[0].mxu0 %v334
  %v402 = vpop.f32.mrb[0].mxu0
  %v403 = vadd.f32 0.0, %v402
  %v404 = vpop.f32.mrb[0].mxu0
  %405 = vdwg.mxu0
  %v406 = vadd.f32 %v148, %v403
  %v407 = vtanh.pop %v406
  %408 = vst.msk [vmem:[#allocation2 + $0x10] sm:$0xff] %vm180, %v407
  %v410 = vsel %vm180, %v407, 0
  %412 = vmatprep.subr.mxu0 0.0
  %413 = vmatpush1.msra.mxu0 %v176
  %414 = vmatprep.subr.mxu0 0.0
  %415 = vmatpush1.msra.mxu0 %v177
  %416 = vmatprep.subr.mxu0 0.0
  %417 = vmatpush1.msra.mxu0 %v178
  %418 = vmatprep.subr.mxu0 0.0
  %419 = vmatpush1.msra.mxu0 %v179
  %420 = vmatprep.subr.mxu0 0.0
  %421 = vmatpush1.msra.mxu0 0.0
  %422 = vmatprep.subr.mxu0 0.0
  %423 = vmatpush1.msra.mxu0 0.0
  %424 = vmatprep.subr.mxu0 0.0
  %425 = vmatpush1.msra.mxu0 0.0
  %426 = vmatprep.subr.mxu0 0.0
  %427 = vmatpush1.msra.mxu0 0.0
  %428 = vmatprep.subr.mxu0 0.0
  %429 = vmatpush1.msra.mxu0 0.0
  %430 = vmatprep.subr.mxu0 0.0
  %431 = vmatpush1.msra.mxu0 0.0
  %432 = vmatprep.subr.mxu0 0.0
  %433 = vmatpush1.msra.mxu0 0.0
  %434 = vmatprep.subr.mxu0 0.0
  %435 = vmatpush1.msra.mxu0 0.0
  %436 = vmatprep.subr.mxu0 0.0
  %437 = vmatpush1.msra.mxu0 0.0
  %438 = vmatprep.subr.mxu0 0.0
  %439 = vmatpush1.msra.mxu0 0.0
  %440 = vmatprep.subr.mxu0 0.0
  %441 = vmatpush1.msra.mxu0 0.0
  %442 = vmatprep.subr.mxu0 0.0
  %443 = vmatpush1.msra.mxu0 0.0
  %444 = vmatprep.subr.mxu0 0.0
  %445 = vmatpush1.msra.mxu0 0.0
  %446 = vmatprep.subr.mxu0 0.0
  %447 = vmatpush1.msra.mxu0 0.0
  %448 = vmatprep.subr.mxu0 0.0
  %449 = vmatpush1.msra.mxu0 0.0
  %450 = vmatprep.subr.mxu0 0.0
  %451 = vmatpush1.msra.mxu0 0.0
  %452 = vmatprep.subr.mxu0 0.0
  %453 = vmatpush1.msra.mxu0 0.0
  %454 = vmatprep.subr.mxu0 0.0
  %455 = vmatpush1.msra.mxu0 0.0
  %456 = vmatprep.subr.mxu0 0.0
  %457 = vmatpush1.msra.mxu0 0.0
  %458 = vmatprep.subr.mxu0 0.0
  %459 = vmatpush1.msra.mxu0 0.0
  %460 = vmatprep.subr.mxu0 0.0
  %461 = vmatpush1.msra.mxu0 0.0
  %462 = vmatprep.subr.mxu0 0.0
  %463 = vmatpush1.msra.mxu0 0.0
  %464 = vmatprep.subr.mxu0 0.0
  %465 = vmatpush1.msra.mxu0 0.0
  %466 = vmatprep.subr.mxu0 0.0
  %467 = vmatpush1.msra.mxu0 0.0
  %468 = vmatprep.subr.mxu0 0.0
  %469 = vmatpush1.msra.mxu0 0.0
  %470 = vmatprep.subr.mxu0 0.0
  %471 = vmatpush1.msra.mxu0 0.0
  %472 = vmatprep.subr.mxu0 0.0
  %473 = vmatpush1.msra.mxu0 0.0
  %474 = vmatprep.subr.mxu0 0.0
  %475 = vmatpush1.msra.mxu0 0.0
  %476 = vmatprep.mubr.f32.mxu0 0.0
  %477 = vmatmul.mubr.f32.gmra.mrb[0].mxu0 %v410
  %v478 = vpop.f32.mrb[0].mxu0
  %v479 = vadd.f32 0.0, %v478
  %v480 = vpop.f32.mrb[0].mxu0
  %481 = vdwg.mxu0
  %v482 = vadd.f32 %v153, %v479
  %v483 = vtanh.pop %v482
  %484 = vst.msk [vmem:[#allocation2 + $0x18] sm:$0xff] %vm180, %v483
  %v486 = vsel %vm180, %v483, 0
  %488 = vmatprep.subr.mxu0 0.0
  %489 = vmatpush1.msra.mxu0 %v176
  %490 = vmatprep.subr.mxu0 0.0
  %491 = vmatpush1.msra.mxu0 %v177
  %492 = vmatprep.subr.mxu0 0.0
  %493 = vmatpush1.msra.mxu0 %v178
  %494 = vmatprep.subr.mxu0 0.0
  %495 = vmatpush1.msra.mxu0 %v179
  %496 = vmatprep.subr.mxu0 0.0
  %497 = vmatpush1.msra.mxu0 0.0
  %498 = vmatprep.subr.mxu0 0.0
  %499 = vmatpush1.msra.mxu0 0.0
  %500 = vmatprep.subr.mxu0 0.0
  %501 = vmatpush1.msra.mxu0 0.0
  %502 = vmatprep.subr.mxu0 0.0
  %503 = vmatpush1.msra.mxu0 0.0
  %504 = vmatprep.subr.mxu0 0.0
  %505 = vmatpush1.msra.mxu0 0.0
  %506 = vmatprep.subr.mxu0 0.0
  %507 = vmatpush1.msra.mxu0 0.0
  %508 = vmatprep.subr.mxu0 0.0
  %509 = vmatpush1.msra.mxu0 0.0
  %510 = vmatprep.subr.mxu0 0.0
  %511 = vmatpush1.msra.mxu0 0.0
  %512 = vmatprep.subr.mxu0 0.0
  %513 = vmatpush1.msra.mxu0 0.0
  %514 = vmatprep.subr.mxu0 0.0
  %515 = vmatpush1.msra.mxu0 0.0
  %516 = vmatprep.subr.mxu0 0.0
  %517 = vmatpush1.msra.mxu0 0.0
  %518 = vmatprep.subr.mxu0 0.0
  %519 = vmatpush1.msra.mxu0 0.0
  %520 = vmatprep.subr.mxu0 0.0
  %521 = vmatpush1.msra.mxu0 0.0
  %522 = vmatprep.subr.mxu0 0.0
  %523 = vmatpush1.msra.mxu0 0.0
  %524 = vmatprep.subr.mxu0 0.0
  %525 = vmatpush1.msra.mxu0 0.0
  %526 = vmatprep.subr.mxu0 0.0
  %527 = vmatpush1.msra.mxu0 0.0
  %528 = vmatprep.subr.mxu0 0.0
  %529 = vmatpush1.msra.mxu0 0.0
  %530 = vmatprep.subr.mxu0 0.0
  %531 = vmatpush1.msra.mxu0 0.0
  %532 = vmatprep.subr.mxu0 0.0
  %533 = vmatpush1.msra.mxu0 0.0
  %534 = vmatprep.subr.mxu0 0.0
  %535 = vmatpush1.msra.mxu0 0.0
  %536 = vmatprep.subr.mxu0 0.0
  %537 = vmatpush1.msra.mxu0 0.0
  %538 = vmatprep.subr.mxu0 0.0
  %539 = vmatpush1.msra.mxu0 0.0
  %540 = vmatprep.subr.mxu0 0.0
  %541 = vmatpush1.msra.mxu0 0.0
  %542 = vmatprep.subr.mxu0 0.0
  %543 = vmatpush1.msra.mxu0 0.0
  %544 = vmatprep.subr.mxu0 0.0
  %545 = vmatpush1.msra.mxu0 0.0
  %546 = vmatprep.subr.mxu0 0.0
  %547 = vmatpush1.msra.mxu0 0.0
  %548 = vmatprep.subr.mxu0 0.0
  %549 = vmatpush1.msra.mxu0 0.0
  %550 = vmatprep.subr.mxu0 0.0
  %551 = vmatpush1.msra.mxu0 0.0
  %552 = vmatprep.mubr.f32.mxu0 0.0
  %553 = vmatmul.mubr.f32.gmra.mrb[0].mxu0 %v486
  %v554 = vpop.f32.mrb[0].mxu0
  %v555 = vadd.f32 0.0, %v554
  %v556 = vpop.f32.mrb[0].mxu0
  %557 = vdwg.mxu0
  %v558 = vadd.f32 %v158, %v555
  %v559 = vtanh.pop %v558
  %560 = vst.msk [vmem:[#allocation2 + $0x20] sm:$0xff] %vm180, %v559
  %v562 = vsel %vm180, %v559, 0
  %564 = vmatprep.subr.mxu0 0.0
  %565 = vmatpush1.msra.mxu0 %v176
  %566 = vmatprep.subr.mxu0 0.0
  %567 = vmatpush1.msra.mxu0 %v177
  %568 = vmatprep.subr.mxu0 0.0
  %569 = vmatpush1.msra.mxu0 %v178
  %570 = vmatprep.subr.mxu0 0.0
  %571 = vmatpush1.msra.mxu0 %v179
  %572 = vmatprep.subr.mxu0 0.0
  %573 = vmatpush1.msra.mxu0 0.0
  %574 = vmatprep.subr.mxu0 0.0
  %575 = vmatpush1.msra.mxu0 0.0
  %576 = vmatprep.subr.mxu0 0.0
  %577 = vmatpush1.msra.mxu0 0.0
  %578 = vmatprep.subr.mxu0 0.0
  %579 = vmatpush1.msra.mxu0 0.0
  %580 = vmatprep.subr.mxu0 0.0
  %581 = vmatpush1.msra.mxu0 0.0
  %582 = vmatprep.subr.mxu0 0.0
  %583 = vmatpush1.msra.mxu0 0.0
  %584 = vmatprep.subr.mxu0 0.0
  %585 = vmatpush1.msra.mxu0 0.0
  %586 = vmatprep.subr.mxu0 0.0
  %587 = vmatpush1.msra.mxu0 0.0
  %588 = vmatprep.subr.mxu0 0.0
  %589 = vmatpush1.msra.mxu0 0.0
  %590 = vmatprep.subr.mxu0 0.0
  %591 = vmatpush1.msra.mxu0 0.0
  %592 = vmatprep.subr.mxu0 0.0
  %593 = vmatpush1.msra.mxu0 0.0
  %594 = vmatprep.subr.mxu0 0.0
  %595 = vmatpush1.msra.mxu0 0.0
  %596 = vmatprep.subr.mxu0 0.0
  %597 = vmatpush1.msra.mxu0 0.0
  %598 = vmatprep.subr.mxu0 0.0
  %599 = vmatpush1.msra.mxu0 0.0
  %600 = vmatprep.subr.mxu0 0.0
  %601 = vmatpush1.msra.mxu0 0.0
  %602 = vmatprep.subr.mxu0 0.0
  %603 = vmatpush1.msra.mxu0 0.0
  %604 = vmatprep.subr.mxu0 0.0
  %605 = vmatpush1.msra.mxu0 0.0
  %606 = vmatprep.subr.mxu0 0.0
  %607 = vmatpush1.msra.mxu0 0.0
  %608 = vmatprep.subr.mxu0 0.0
  %609 = vmatpush1.msra.mxu0 0.0
  %610 = vmatprep.subr.mxu0 0.0
  %611 = vmatpush1.msra.mxu0 0.0
  %612 = vmatprep.subr.mxu0 0.0
  %613 = vmatpush1.msra.mxu0 0.0
  %614 = vmatprep.subr.mxu0 0.0
  %615 = vmatpush1.msra.mxu0 0.0
  %616 = vmatprep.subr.mxu0 0.0
  %617 = vmatpush1.msra.mxu0 0.0
  %618 = vmatprep.subr.mxu0 0.0
  %619 = vmatpush1.msra.mxu0 0.0
  %620 = vmatprep.subr.mxu0 0.0
  %621 = vmatpush1.msra.mxu0 0.0
  %622 = vmatprep.subr.mxu0 0.0
  %623 = vmatpush1.msra.mxu0 0.0
  %624 = vmatprep.subr.mxu0 0.0
  %625 = vmatpush1.msra.mxu0 0.0
  %626 = vmatprep.subr.mxu0 0.0
  %627 = vmatpush1.msra.mxu0 0.0
  %628 = vmatprep.mubr.f32.mxu0 0.0
  %629 = vmatmul.mubr.f32.gmra.mrb[0].mxu0 %v562
  %v630 = vpop.f32.mrb[0].mxu0
  %v631 = vadd.f32 0.0, %v630
  %v632 = vpop.f32.mrb[0].mxu0
  %633 = vdwg.mxu0
  %v634 = vadd.f32 %v163, %v631
  %v635 = vtanh.pop %v634
  %636 = vst.msk [vmem:[#allocation2 + $0x28] sm:$0xff] %vm180, %v635
  %v638 = vsel %vm180, %v635, 0
  %640 = vmatprep.subr.mxu0 0.0
  %641 = vmatpush1.msra.mxu0 %v176
  %642 = vmatprep.subr.mxu0 0.0
  %643 = vmatpush1.msra.mxu0 %v177
  %644 = vmatprep.subr.mxu0 0.0
  %645 = vmatpush1.msra.mxu0 %v178
  %646 = vmatprep.subr.mxu0 0.0
  %647 = vmatpush1.msra.mxu0 %v179
  %648 = vmatprep.subr.mxu0 0.0
  %649 = vmatpush1.msra.mxu0 0.0
  %650 = vmatprep.subr.mxu0 0.0
  %651 = vmatpush1.msra.mxu0 0.0
  %652 = vmatprep.subr.mxu0 0.0
  %653 = vmatpush1.msra.mxu0 0.0
  %654 = vmatprep.subr.mxu0 0.0
  %655 = vmatpush1.msra.mxu0 0.0
  %656 = vmatprep.subr.mxu0 0.0
  %657 = vmatpush1.msra.mxu0 0.0
  %658 = vmatprep.subr.mxu0 0.0
  %659 = vmatpush1.msra.mxu0 0.0
  %660 = vmatprep.subr.mxu0 0.0
  %661 = vmatpush1.msra.mxu0 0.0
  %662 = vmatprep.subr.mxu0 0.0
  %663 = vmatpush1.msra.mxu0 0.0
  %664 = vmatprep.subr.mxu0 0.0
  %665 = vmatpush1.msra.mxu0 0.0
  %666 = vmatprep.subr.mxu0 0.0
  %667 = vmatpush1.msra.mxu0 0.0
  %668 = vmatprep.subr.mxu0 0.0
  %669 = vmatpush1.msra.mxu0 0.0
  %670 = vmatprep.subr.mxu0 0.0
  %671 = vmatpush1.msra.mxu0 0.0
  %672 = vmatprep.subr.mxu0 0.0
  %673 = vmatpush1.msra.mxu0 0.0
  %674 = vmatprep.subr.mxu0 0.0
  %675 = vmatpush1.msra.mxu0 0.0
  %676 = vmatprep.subr.mxu0 0.0
  %677 = vmatpush1.msra.mxu0 0.0
  %678 = vmatprep.subr.mxu0 0.0
  %679 = vmatpush1.msra.mxu0 0.0
  %680 = vmatprep.subr.mxu0 0.0
  %681 = vmatpush1.msra.mxu0 0.0
  %682 = vmatprep.subr.mxu0 0.0
  %683 = vmatpush1.msra.mxu0 0.0
  %684 = vmatprep.subr.mxu0 0.0
  %685 = vmatpush1.msra.mxu0 0.0
  %686 = vmatprep.subr.mxu0 0.0
  %687 = vmatpush1.msra.mxu0 0.0
  %688 = vmatprep.subr.mxu0 0.0
  %689 = vmatpush1.msra.mxu0 0.0
  %690 = vmatprep.subr.mxu0 0.0
  %691 = vmatpush1.msra.mxu0 0.0
  %692 = vmatprep.subr.mxu0 0.0
  %693 = vmatpush1.msra.mxu0 0.0
  %694 = vmatprep.subr.mxu0 0.0
  %695 = vmatpush1.msra.mxu0 0.0
  %696 = vmatprep.subr.mxu0 0.0
  %697 = vmatpush1.msra.mxu0 0.0
  %698 = vmatprep.subr.mxu0 0.0
  %699 = vmatpush1.msra.mxu0 0.0
  %700 = vmatprep.subr.mxu0 0.0
  %701 = vmatpush1.msra.mxu0 0.0
  %702 = vmatprep.subr.mxu0 0.0
  %703 = vmatpush1.msra.mxu0 0.0
  %704 = vmatprep.mubr.f32.mxu0 0.0
  %705 = vmatmul.mubr.f32.gmra.mrb[0].mxu0 %v638
  %v706 = vpop.f32.mrb[0].mxu0
  %v707 = vadd.f32 0.0, %v706
  %v708 = vpop.f32.mrb[0].mxu0
  %709 = vdwg.mxu0
  %v710 = vadd.f32 %v168, %v707
  %v711 = vtanh.pop %v710
  %712 = vst.msk [vmem:[#allocation2 + $0x30] sm:$0xff] %vm180, %v711
  %v714 = vsel %vm180, %v711, 0
  %716 = vmatprep.subr.mxu0 0.0
  %717 = vmatpush1.msra.mxu0 %v176
  %718 = vmatprep.subr.mxu0 0.0
  %719 = vmatpush1.msra.mxu0 %v177
  %720 = vmatprep.subr.mxu0 0.0
  %721 = vmatpush1.msra.mxu0 %v178
  %722 = vmatprep.subr.mxu0 0.0
  %723 = vmatpush1.msra.mxu0 %v179
  %724 = vmatprep.subr.mxu0 0.0
  %725 = vmatpush1.msra.mxu0 0.0
  %726 = vmatprep.subr.mxu0 0.0
  %727 = vmatpush1.msra.mxu0 0.0
  %728 = vmatprep.subr.mxu0 0.0
  %729 = vmatpush1.msra.mxu0 0.0
  %730 = vmatprep.subr.mxu0 0.0
  %731 = vmatpush1.msra.mxu0 0.0
  %732 = vmatprep.subr.mxu0 0.0
  %733 = vmatpush1.msra.mxu0 0.0
  %734 = vmatprep.subr.mxu0 0.0
  %735 = vmatpush1.msra.mxu0 0.0
  %736 = vmatprep.subr.mxu0 0.0
  %737 = vmatpush1.msra.mxu0 0.0
  %738 = vmatprep.subr.mxu0 0.0
  %739 = vmatpush1.msra.mxu0 0.0
  %740 = vmatprep.subr.mxu0 0.0
  %741 = vmatpush1.msra.mxu0 0.0
  %742 = vmatprep.subr.mxu0 0.0
  %743 = vmatpush1.msra.mxu0 0.0
  %744 = vmatprep.subr.mxu0 0.0
  %745 = vmatpush1.msra.mxu0 0.0
  %746 = vmatprep.subr.mxu0 0.0
  %747 = vmatpush1.msra.mxu0 0.0
  %748 = vmatprep.subr.mxu0 0.0
  %749 = vmatpush1.msra.mxu0 0.0
  %750 = vmatprep.subr.mxu0 0.0
  %751 = vmatpush1.msra.mxu0 0.0
  %752 = vmatprep.subr.mxu0 0.0
  %753 = vmatpush1.msra.mxu0 0.0
  %754 = vmatprep.subr.mxu0 0.0
  %755 = vmatpush1.msra.mxu0 0.0
  %756 = vmatprep.subr.mxu0 0.0
  %757 = vmatpush1.msra.mxu0 0.0
  %758 = vmatprep.subr.mxu0 0.0
  %759 = vmatpush1.msra.mxu0 0.0
  %760 = vmatprep.subr.mxu0 0.0
  %761 = vmatpush1.msra.mxu0 0.0
  %762 = vmatprep.subr.mxu0 0.0
  %763 = vmatpush1.msra.mxu0 0.0
  %764 = vmatprep.subr.mxu0 0.0
  %765 = vmatpush1.msra.mxu0 0.0
  %766 = vmatprep.subr.mxu0 0.0
  %767 = vmatpush1.msra.mxu0 0.0
  %768 = vmatprep.subr.mxu0 0.0
  %769 = vmatpush1.msra.mxu0 0.0
  %770 = vmatprep.subr.mxu0 0.0
  %771 = vmatpush1.msra.mxu0 0.0
  %772 = vmatprep.subr.mxu0 0.0
  %773 = vmatpush1.msra.mxu0 0.0
  %774 = vmatprep.subr.mxu0 0.0
  %775 = vmatpush1.msra.mxu0 0.0
  %776 = vmatprep.subr.mxu0 0.0
  %777 = vmatpush1.msra.mxu0 0.0
  %778 = vmatprep.subr.mxu0 0.0
  %779 = vmatpush1.msra.mxu0 0.0
  %780 = vmatprep.mubr.f32.mxu0 0.0
  %781 = vmatmul.mubr.f32.gmra.mrb[0].mxu0 %v714
  %v782 = vpop.f32.mrb[0].mxu0
  %v783 = vadd.f32 0.0, %v782
  %v784 = vpop.f32.mrb[0].mxu0
  %785 = vdwg.mxu0
  %v786 = vadd.f32 %v173, %v783
  %v787 = vtanh.pop %v786
  %788 = vst.msk [vmem:[#allocation2 + $0x38] sm:$0xff] %vm180, %v787
  %v789 = vld [vmem:[#allocation2] sm:$0xff]
  %v790 = vld [vmem:[#allocation2 + $0x8] sm:$0xff]
  %v791 = vld [vmem:[#allocation2 + $0x10] sm:$0xff]
  %v792 = vld [vmem:[#allocation2 + $0x18] sm:$0xff]
  %v793 = vld [vmem:[#allocation2 + $0x20] sm:$0xff]
  %v794 = vld [vmem:[#allocation2 + $0x28] sm:$0xff]
  %v795 = vld [vmem:[#allocation2 + $0x30] sm:$0xff]
  %v796 = vld [vmem:[#allocation2 + $0x38] sm:$0xff]
  %v797 = vld [vmem:[%s4] sm:$0xff]
  %v798 = vld [vmem:[%s4 + $0x8] sm:$0xff]
  %v799 = vld [vmem:[%s4 + $0x10] sm:$0xff]
  %v800 = vld [vmem:[%s4 + $0x18] sm:$0xff]
  %v801 = vld [vmem:[%s5] sm:$0x1]
  %v803 = vlaneseq
  %v804 = vshrl.u32 %v803, 7
  %v805 = vsub.s32 0, %v804
  %v806 = vrot.slane %v801, %v805
  %v809 = vsel %vm180, %v789, 0
  %v812 = vsel %vm180, %v790, 0
  %v815 = vsel %vm180, %v791, 0
  %v818 = vsel %vm180, %v792, 0
  %v821 = vsel %vm180, %v793, 0
  %v824 = vsel %vm180, %v794, 0
  %v827 = vsel %vm180, %v795, 0
  %v830 = vsel %vm180, %v796, 0
  %832 = vmatprep.subr.mxu0 0.0
  %833 = vmatpush1.msra.mxu0 %v797
  %834 = vmatprep.subr.mxu0 0.0
  %835 = vmatpush1.msra.mxu0 %v798
  %836 = vmatprep.subr.mxu0 0.0
  %837 = vmatpush1.msra.mxu0 %v799
  %838 = vmatprep.subr.mxu0 0.0
  %839 = vmatpush1.msra.mxu0 %v800
  %840 = vmatprep.subr.mxu0 0.0
  %841 = vmatpush1.msra.mxu0 0.0
  %842 = vmatprep.subr.mxu0 0.0
  %843 = vmatpush1.msra.mxu0 0.0
  %844 = vmatprep.subr.mxu0 0.0
  %845 = vmatpush1.msra.mxu0 0.0
  %846 = vmatprep.subr.mxu0 0.0
  %847 = vmatpush1.msra.mxu0 0.0
  %848 = vmatprep.subr.mxu0 0.0
  %849 = vmatpush1.msra.mxu0 0.0
  %850 = vmatprep.subr.mxu0 0.0
  %851 = vmatpush1.msra.mxu0 0.0
  %852 = vmatprep.subr.mxu0 0.0
  %853 = vmatpush1.msra.mxu0 0.0
  %854 = vmatprep.subr.mxu0 0.0
  %855 = vmatpush1.msra.mxu0 0.0
  %856 = vmatprep.subr.mxu0 0.0
  %857 = vmatpush1.msra.mxu0 0.0
  %858 = vmatprep.subr.mxu0 0.0
  %859 = vmatpush1.msra.mxu0 0.0
  %860 = vmatprep.subr.mxu0 0.0
  %861 = vmatpush1.msra.mxu0 0.0
  %862 = vmatprep.subr.mxu0 0.0
  %863 = vmatpush1.msra.mxu0 0.0
  %864 = vmatprep.subr.mxu0 0.0
  %865 = vmatpush1.msra.mxu0 0.0
  %866 = vmatprep.subr.mxu0 0.0
  %867 = vmatpush1.msra.mxu0 0.0
  %868 = vmatprep.subr.mxu0 0.0
  %869 = vmatpush1.msra.mxu0 0.0
  %870 = vmatprep.subr.mxu0 0.0
  %871 = vmatpush1.msra.mxu0 0.0
  %872 = vmatprep.subr.mxu0 0.0
  %873 = vmatpush1.msra.mxu0 0.0
  %874 = vmatprep.subr.mxu0 0.0
  %875 = vmatpush1.msra.mxu0 0.0
  %876 = vmatprep.subr.mxu0 0.0
  %877 = vmatpush1.msra.mxu0 0.0
  %878 = vmatprep.subr.mxu0 0.0
  %879 = vmatpush1.msra.mxu0 0.0
  %880 = vmatprep.subr.mxu0 0.0
  %881 = vmatpush1.msra.mxu0 0.0
  %882 = vmatprep.subr.mxu0 0.0
  %883 = vmatpush1.msra.mxu0 0.0
  %884 = vmatprep.subr.mxu0 0.0
  %885 = vmatpush1.msra.mxu0 0.0
  %886 = vmatprep.subr.mxu0 0.0
  %887 = vmatpush1.msra.mxu0 0.0
  %888 = vmatprep.subr.mxu0 0.0
  %889 = vmatpush1.msra.mxu0 0.0
  %890 = vmatprep.subr.mxu0 0.0
  %891 = vmatpush1.msra.mxu0 0.0
  %892 = vmatprep.subr.mxu0 0.0
  %893 = vmatpush1.msra.mxu0 0.0
  %894 = vmatprep.subr.mxu0 0.0
  %895 = vmatpush1.msra.mxu0 0.0
  %896 = vmatprep.mubr.f32.mxu0 0.0
  %897 = vmatmul.mubr.f32.gmra.mrb[0].mxu0 %v809
  %v898 = vpop.f32.mrb[0].mxu0
  %v899 = vadd.f32 %v806, %v898
  %v900 = vpop.f32.mrb[0].mxu0
  %901 = vmatprep.mubr.f32.mxu0 0.0
  %902 = vmatmul.mubr.f32.gmra.mrb[0].mxu0 %v812
  %v903 = vpop.f32.mrb[0].mxu0
  %v904 = vadd.f32 %v806, %v903
  %v905 = vpop.f32.mrb[0].mxu0
  %906 = vmatprep.mubr.f32.mxu0 0.0
  %907 = vmatmul.mubr.f32.gmra.mrb[0].mxu0 %v815
  %v908 = vpop.f32.mrb[0].mxu0
  %v909 = vadd.f32 %v806, %v908
  %v910 = vpop.f32.mrb[0].mxu0
  %911 = vmatprep.mubr.f32.mxu0 0.0
  %912 = vmatmul.mubr.f32.gmra.mrb[0].mxu0 %v818
  %v913 = vpop.f32.mrb[0].mxu0
  %v914 = vadd.f32 %v806, %v913
  %v915 = vpop.f32.mrb[0].mxu0
  %916 = vmatprep.mubr.f32.mxu0 0.0
  %917 = vmatmul.mubr.f32.gmra.mrb[0].mxu0 %v821
  %v918 = vpop.f32.mrb[0].mxu0
  %v919 = vadd.f32 %v806, %v918
  %v920 = vpop.f32.mrb[0].mxu0
  %921 = vmatprep.mubr.f32.mxu0 0.0
  %922 = vmatmul.mubr.f32.gmra.mrb[0].mxu0 %v824
  %v923 = vpop.f32.mrb[0].mxu0
  %v924 = vadd.f32 %v806, %v923
  %v925 = vpop.f32.mrb[0].mxu0
  %926 = vmatprep.mubr.f32.mxu0 0.0
  %927 = vmatmul.mubr.f32.gmra.mrb[0].mxu0 %v827
  %v928 = vpop.f32.mrb[0].mxu0
  %v929 = vadd.f32 %v806, %v928
  %v930 = vpop.f32.mrb[0].mxu0
  %931 = vmatprep.mubr.f32.mxu0 0.0
  %932 = vmatmul.mubr.f32.gmra.mrb[0].mxu0 %v830
  %v933 = vpop.f32.mrb[0].mxu0
  %v934 = vadd.f32 %v806, %v933
  %v935 = vpop.f32.mrb[0].mxu0
  %936 = vdwg.mxu0
  %v937 = vld [vmem:[%s6] sm:$0xff]
  %v938 = vld [vmem:[%s6 + $0x8] sm:$0xff]
  %v939 = vld [vmem:[%s6 + $0x10] sm:$0xff]
  %v940 = vld [vmem:[%s6 + $0x18] sm:$0xff]
  %v941 = vld [vmem:[%s7] sm:$0x1]
  %v943 = vlaneseq
  %v944 = vshrl.u32 %v943, 7
  %v945 = vsub.s32 0, %v944
  %v946 = vrot.slane %v941, %v945
  %v949 = vsel %vm180, %v899, 0
  %v952 = vsel %vm180, %v904, 0
  %v955 = vsel %vm180, %v909, 0
  %v958 = vsel %vm180, %v914, 0
  %v961 = vsel %vm180, %v919, 0
  %v964 = vsel %vm180, %v924, 0
  %v967 = vsel %vm180, %v929, 0
  %v970 = vsel %vm180, %v934, 0
  %972 = vmatprep.subr.mxu0 0.0
  %973 = vmatpush1.msra.mxu0 %v937
  %974 = vmatprep.subr.mxu0 0.0
  %975 = vmatpush1.msra.mxu0 %v938
  %976 = vmatprep.subr.mxu0 0.0
  %977 = vmatpush1.msra.mxu0 %v939
  %978 = vmatprep.subr.mxu0 0.0
  %979 = vmatpush1.msra.mxu0 %v940
  %980 = vmatprep.subr.mxu0 0.0
  %981 = vmatpush1.msra.mxu0 0.0
  %982 = vmatprep.subr.mxu0 0.0
  %983 = vmatpush1.msra.mxu0 0.0
  %984 = vmatprep.subr.mxu0 0.0
  %985 = vmatpush1.msra.mxu0 0.0
  %986 = vmatprep.subr.mxu0 0.0
  %987 = vmatpush1.msra.mxu0 0.0
  %988 = vmatprep.subr.mxu0 0.0
  %989 = vmatpush1.msra.mxu0 0.0
  %990 = vmatprep.subr.mxu0 0.0
  %991 = vmatpush1.msra.mxu0 0.0
  %992 = vmatprep.subr.mxu0 0.0
  %993 = vmatpush1.msra.mxu0 0.0
  %994 = vmatprep.subr.mxu0 0.0
  %995 = vmatpush1.msra.mxu0 0.0
  %996 = vmatprep.subr.mxu0 0.0
  %997 = vmatpush1.msra.mxu0 0.0
  %998 = vmatprep.subr.mxu0 0.0
  %999 = vmatpush1.msra.mxu0 0.0
  %1000 = vmatprep.subr.mxu0 0.0
  %1001 = vmatpush1.msra.mxu0 0.0
  %1002 = vmatprep.subr.mxu0 0.0
  %1003 = vmatpush1.msra.mxu0 0.0
  %1004 = vmatprep.subr.mxu0 0.0
  %1005 = vmatpush1.msra.mxu0 0.0
  %1006 = vmatprep.subr.mxu0 0.0
  %1007 = vmatpush1.msra.mxu0 0.0
  %1008 = vmatprep.subr.mxu0 0.0
  %1009 = vmatpush1.msra.mxu0 0.0
  %1010 = vmatprep.subr.mxu0 0.0
  %1011 = vmatpush1.msra.mxu0 0.0
  %1012 = vmatprep.subr.mxu0 0.0
  %1013 = vmatpush1.msra.mxu0 0.0
  %1014 = vmatprep.subr.mxu0 0.0
  %1015 = vmatpush1.msra.mxu0 0.0
  %1016 = vmatprep.subr.mxu0 0.0
  %1017 = vmatpush1.msra.mxu0 0.0
  %1018 = vmatprep.subr.mxu0 0.0
  %1019 = vmatpush1.msra.mxu0 0.0
  %1020 = vmatprep.subr.mxu0 0.0
  %1021 = vmatpush1.msra.mxu0 0.0
  %1022 = vmatprep.subr.mxu0 0.0
  %1023 = vmatpush1.msra.mxu0 0.0
  %1024 = vmatprep.subr.mxu0 0.0
  %1025 = vmatpush1.msra.mxu0 0.0
  %1026 = vmatprep.subr.mxu0 0.0
  %1027 = vmatpush1.msra.mxu0 0.0
  %1028 = vmatprep.subr.mxu0 0.0
  %1029 = vmatpush1.msra.mxu0 0.0
  %1030 = vmatprep.subr.mxu0 0.0
  %1031 = vmatpush1.msra.mxu0 0.0
  %1032 = vmatprep.subr.mxu0 0.0
  %1033 = vmatpush1.msra.mxu0 0.0
  %1034 = vmatprep.subr.mxu0 0.0
  %1035 = vmatpush1.msra.mxu0 0.0
  %1036 = vmatprep.mubr.f32.mxu0 0.0
  %1037 = vmatmul.mubr.f32.gmra.mrb[0].mxu0 %v949
  %v1038 = vpop.f32.mrb[0].mxu0
  %v1039 = vadd.f32 %v946, %v1038
  %v1040 = vpop.f32.mrb[0].mxu0
  %1041 = vmatprep.mubr.f32.mxu0 0.0
  %1042 = vmatmul.mubr.f32.gmra.mrb[0].mxu0 %v952
  %v1043 = vpop.f32.mrb[0].mxu0
  %v1044 = vadd.f32 %v946, %v1043
  %v1045 = vpop.f32.mrb[0].mxu0
  %1046 = vmatprep.mubr.f32.mxu0 0.0
  %1047 = vmatmul.mubr.f32.gmra.mrb[0].mxu0 %v955
  %v1048 = vpop.f32.mrb[0].mxu0
  %v1049 = vadd.f32 %v946, %v1048
  %v1050 = vpop.f32.mrb[0].mxu0
  %1051 = vmatprep.mubr.f32.mxu0 0.0
  %1052 = vmatmul.mubr.f32.gmra.mrb[0].mxu0 %v958
  %v1053 = vpop.f32.mrb[0].mxu0
  %v1054 = vadd.f32 %v946, %v1053
  %v1055 = vpop.f32.mrb[0].mxu0
  %1056 = vmatprep.mubr.f32.mxu0 0.0
  %1057 = vmatmul.mubr.f32.gmra.mrb[0].mxu0 %v961
  %v1058 = vpop.f32.mrb[0].mxu0
  %v1059 = vadd.f32 %v946, %v1058
  %v1060 = vpop.f32.mrb[0].mxu0
  %1061 = vmatprep.mubr.f32.mxu0 0.0
  %1062 = vmatmul.mubr.f32.gmra.mrb[0].mxu0 %v964
  %v1063 = vpop.f32.mrb[0].mxu0
  %v1064 = vadd.f32 %v946, %v1063
  %v1065 = vpop.f32.mrb[0].mxu0
  %1066 = vmatprep.mubr.f32.mxu0 0.0
  %1067 = vmatmul.mubr.f32.gmra.mrb[0].mxu0 %v967
  %v1068 = vpop.f32.mrb[0].mxu0
  %v1069 = vadd.f32 %v946, %v1068
  %v1070 = vpop.f32.mrb[0].mxu0
  %1071 = vmatprep.mubr.f32.mxu0 0.0
  %1072 = vmatmul.mubr.f32.gmra.mrb[0].mxu0 %v970
  %v1073 = vpop.f32.mrb[0].mxu0
  %v1074 = vadd.f32 %v946, %v1073
  %v1075 = vpop.f32.mrb[0].mxu0
  %1076 = vdwg.mxu0
  %vm1077 = vcmask 64512
  %1078 = vst.msk [vmem:[%s8] sm:$0xff] %vm1077, %v1039
  %1079 = vst.msk [vmem:[%s8 + $0x8] sm:$0xff] %vm1077, %v1044
  %1080 = vst.msk [vmem:[%s8 + $0x10] sm:$0xff] %vm1077, %v1049
  %1081 = vst.msk [vmem:[%s8 + $0x18] sm:$0xff] %vm1077, %v1054
  %1082 = vst.msk [vmem:[%s8 + $0x20] sm:$0xff] %vm1077, %v1059
  %1083 = vst.msk [vmem:[%s8 + $0x28] sm:$0xff] %vm1077, %v1064
  %1084 = vst.msk [vmem:[%s8 + $0x30] sm:$0xff] %vm1077, %v1069
  %1085 = vst.msk [vmem:[%s8 + $0x38] sm:$0xff] %vm1077, %v1074
  // Predicated region
  $region34: #{tpu_custom_call.1} parent=0 // pred_check
    _
  $region35: #{tpu_custom_call.1} parent=0 // pred_check_branch
    %1087 = sbr.rel (0) target = $region37
  $region36: #{tpu_custom_call.1} parent=0 // pred_region
    _
  $region37: #{tpu_custom_call.1} parent=0 // pred_fallthru
    _
  // Predicated region
  $region38: #{tpu_custom_call.1} parent=0 // pred_check
    _
  $region39: #{tpu_custom_call.1} parent=0 // pred_check_branch
    %1089 = sbr.rel (0) target = $region41
  $region40: #{tpu_custom_call.1} parent=0 // pred_region
    _
  $region41: #{tpu_custom_call.1} parent=0 // pred_fallthru
    _

</llo_original>
